<compile_context>
chip_gen: v7x
topology: tpu7x:2x2x1
jax: 0.10.0
libtpu: 0.0.40
codegen_flags: <defaults>
</compile_context>

<pallas_src>
import functools

import jax
import jax.numpy as jnp
from jax import lax
from jax.experimental import pallas as pl
from jax.experimental.pallas import tpu as pltpu


def _round_up(x: int, m: int) -> int:
    return ((x + m - 1) // m) * m


def _logreg_kernel(x_ref, wt_ref, b_ref, o_ref):
    # x_ref: (TILE_N, D), wt_ref: (D, C), b_ref: (1, C), o_ref: (TILE_N, C)
    s = lax.dot_general(
        x_ref[...], wt_ref[...],
        dimension_numbers=(((1,), (0,)), ((), ())),
        preferred_element_type=jnp.float32,
    ) + b_ref[...]

    # Numerically-stable softmax over the class axis (exact divide: the kernel
    # is HBM-bound, so the EUP/VALU cost of the true divide is hidden).
    m = jnp.max(s, axis=1, keepdims=True)
    e = jnp.exp(s - m)
    denom = jnp.sum(e, axis=1, keepdims=True)
    o_ref[...] = (e / denom).astype(o_ref.dtype)


@functools.lru_cache(maxsize=1)
def _vmem_params():
    """Returns (tile VMEM budget bytes, vmem_limit_bytes or None)."""
    phys = None
    try:
        info = pltpu.get_tpu_info()
        for name in ("vmem_capacity_bytes", "vmem_bytes", "vmem_size_bytes"):
            v = getattr(info, name, None)
            if v:
                phys = int(v)
                break
    except Exception:
        phys = None
    if phys is None:
        # Unknown part: stay under every generation's default scoped limit.
        return 13 * 1024 * 1024, None
    if phys <= 64 * 1024 * 1024:
        # v7x: 64 MiB physical per TensorCore, 32 MiB scoped default.
        return 20 * 1024 * 1024, 28 * 1024 * 1024
    # v5e / v6e: 128 MiB physical.
    return 24 * 1024 * 1024, 30 * 1024 * 1024


def _choose_tile_n(n: int, d: int, c: int, x_itemsize: int, budget: int) -> int:
    # Resident operands: W.T and b (the pipeline still allocates 2 buffers each
    # even though their index maps are constant).
    resident = 2 * (d * c * x_itemsize + c * 4)
    # Per batch row: double-buffered X tile (compute dtype) + output tile (f32).
    per_row = 2 * (d * x_itemsize + c * 4)
    tile = (budget - resident) // max(per_row, 1)
    tile = max(128, min(tile, 2048))          # DMA efficiency saturates ~1-2k rows
    tile = (tile // 128) * 128                # MXU / sublane-pack friendly
    align = 8 if x_itemsize >= 4 else 16
    n_cover = _round_up(max(n, align), align)
    if tile >= n_cover:                       # whole batch fits in one grid step
        tile = n_cover
    return tile


@functools.partial(jax.jit, static_argnames=("tile_n",))
def pt_logreg_forward(X, W, b, *, tile_n=None):
    """softmax(X @ W.T + b, axis=1).  X: (N, D), W: (C, D), b: (C,) -> (N, C) f32."""
    N, D = X.shape
    C, D2 = W.shape
    assert D == D2, "X and W feature dims must match"

    # Keep bf16 inputs in bf16 for the MXU (f32 accumulation); everything else f32.
    compute_dtype = X.dtype if X.dtype in (jnp.bfloat16, jnp.float32) else jnp.float32
    Xc = X.astype(compute_dtype)              # no-op for f32/bf16 inputs
    Wt = W.T.astype(compute_dtype)            # (D, C): one-time, tiny
    b2 = b.reshape(1, C).astype(jnp.float32)

    budget, vmem_limit = _vmem_params()
    itemsize = jnp.dtype(compute_dtype).itemsize
    if tile_n is None:
        tile_n = _choose_tile_n(N, D, C, itemsize, budget)
    grid = (pl.cdiv(N, tile_n),)

    cost = pl.CostEstimate(
        flops=2 * N * D * C,
        transcendentals=N * C,
        bytes_accessed=itemsize * (N * D + C * D) + 4 * (C + N * C),
    )

    cp_kwargs = dict(dimension_semantics=("parallel",))
    if vmem_limit is not None:
        cp_kwargs["vmem_limit_bytes"] = vmem_limit

    return pl.pallas_call(
        _logreg_kernel,
        out_shape=jax.ShapeDtypeStruct((N, C), jnp.float32),
        grid=grid,
        in_specs=[
            pl.BlockSpec((tile_n, D), lambda i: (i, 0)),  # X: pipelined over the batch
            pl.BlockSpec((D, C), lambda i: (0, 0)),       # W.T: resident across grid
            pl.BlockSpec((1, C), lambda i: (0, 0)),       # b:   resident across grid
        ],
        out_specs=pl.BlockSpec((tile_n, C), lambda i: (i, 0)),
        compiler_params=pltpu.CompilerParams(**cp_kwargs),
        cost_estimate=cost,
    )(Xc, Wt, b2)


def _reference(X, W, b):
    s = X.astype(jnp.float32) @ W.astype(jnp.float32).T + b.astype(jnp.float32)[None, :]
    s = s - jnp.max(s, axis=1, keepdims=True)
    e = jnp.exp(s)
    return e / jnp.sum(e, axis=1, keepdims=True)


def _check(N, D, C, key, tile_n=None):
    kx, kw = jax.random.split(key)
    X = jax.random.normal(kx, (N, D), dtype=jnp.float32)
    W = jax.random.normal(kw, (C, D), dtype=jnp.float32)
    b = jnp.zeros((C,), dtype=jnp.float32)

    probs = pt_logreg_forward(X, W, b, tile_n=tile_n)
    jax.block_until_ready(probs)

    ref = _reference(X, W, b)
    assert probs.shape == (N, C)
    assert jnp.allclose(probs, ref, atol=2e-3, rtol=2e-3), "mismatch vs reference"
    assert jnp.allclose(jnp.sum(probs, axis=1), 1.0, atol=1e-3), "rows must sum to 1"


if __name__ == "__main__":
    # Deterministic synthetic parameters (PTLogreg(D, C): W ~ randn(C, D), b = 0).
    key = jax.random.PRNGKey(0)
    k1, k2, k3 = jax.random.split(key, 3)

    # Small case matching the module's typical lab scale (shrunk): PTLogreg(32, 16).
    _check(N=8, D=32, C=16, key=k1)
    # Unaligned D / C (no padding anywhere), whole batch in one grid step.
    _check(N=100, D=70, C=10, key=k2)
    # Forced small tile: multi-step grid + masked writeback of the partial last block.
    _check(N=300, D=70, C=10, key=k3, tile_n=128)

    print("KERNEL_OK")
</pallas_src>

<mosaic_0001>
module attributes {stable_mosaic.version = 11 : i64} {
  func.func @_logreg_kernel(%arg0: i32, %arg1: memref<8x32xf32, #tpu.memory_space<vmem>>, %arg2: memref<32x16xf32, #tpu.memory_space<vmem>>, %arg3: memref<1x16xf32, #tpu.memory_space<vmem>>, %arg4: memref<8x16xf32, #tpu.memory_space<vmem>>) attributes {dimension_semantics = [#tpu.dimension_semantics<parallel>], iteration_bounds = array<i64: 1>, scalar_prefetch = 0 : i64, scratch_operands = 0 : i64, tpu.core_type = #tpu.core_type<tc>, window_params = [{transform_indices = @transform_0, window_bounds = array<i64: 8, 32>}, {pipeline_mode = #tpu.pipeline_mode<synchronous>, transform_indices = @transform_1, window_bounds = array<i64: 32, 16>}, {pipeline_mode = #tpu.pipeline_mode<synchronous>, transform_indices = @transform_2, window_bounds = array<i64: 1, 16>}, {transform_indices = @transform_3, window_bounds = array<i64: 8, 16>}]} {
    %c0 = arith.constant 0 : index
    %c0_0 = arith.constant 0 : index
    %0 = vector.load %arg1[%c0, %c0_0] : memref<8x32xf32, #tpu.memory_space<vmem>>, vector<8x32xf32>
    %c0_1 = arith.constant 0 : index
    %c0_2 = arith.constant 0 : index
    %1 = vector.load %arg2[%c0_1, %c0_2] : memref<32x16xf32, #tpu.memory_space<vmem>>, vector<32x16xf32>
    %cst = arith.constant dense<0.000000e+00> : vector<8x16xf32>
    %2 = tpu.matmul %0, %1, %cst {dimension_numbers = #tpu.dot_dimension_numbers<[1], [0], [0], [1], [0, 0, 1, 1], [], []>} : vector<8x32xf32>, vector<32x16xf32>, vector<8x16xf32> -> vector<8x16xf32>
    %c0_3 = arith.constant 0 : index
    %c0_4 = arith.constant 0 : index
    %3 = vector.load %arg3[%c0_3, %c0_4] : memref<1x16xf32, #tpu.memory_space<vmem>>, vector<1x16xf32>
    %4 = vector.broadcast %3 : vector<1x16xf32> to vector<8x16xf32>
    %5 = arith.addf %2, %4 : vector<8x16xf32>
    %cst_5 = arith.constant dense<0xFF800000> : vector<8xf32>
    %6 = vector.multi_reduction <maximumf>, %5, %cst_5 [1] : vector<8x16xf32> to vector<8xf32>
    %7 = vector.shape_cast %6 : vector<8xf32> to vector<8x1xf32>
    %8 = vector.broadcast %7 : vector<8x1xf32> to vector<8x16xf32>
    %9 = arith.subf %5, %8 : vector<8x16xf32>
    %10 = math.exp %9 : vector<8x16xf32>
    %cst_6 = arith.constant dense<0.000000e+00> : vector<8xf32>
    %11 = vector.multi_reduction <add>, %10, %cst_6 [1] : vector<8x16xf32> to vector<8xf32>
    %12 = vector.shape_cast %11 : vector<8xf32> to vector<8x1xf32>
    %13 = vector.broadcast %12 : vector<8x1xf32> to vector<8x16xf32>
    %14 = arith.divf %10, %13 : vector<8x16xf32>
    %c0_7 = arith.constant 0 : index
    %c0_8 = arith.constant 0 : index
    %15 = vector.load %arg4[%c0_7, %c0_8] : memref<8x16xf32, #tpu.memory_space<vmem>>, vector<8x16xf32>
    tpu.vector_store %arg4[%c0_7, %c0_8], %14 {strides = array<i32>} : memref<8x16xf32, #tpu.memory_space<vmem>>, vector<8x16xf32>,
    return
  }
  func.func @transform_0(%arg0: i32) -> (i32, i32) {
    %c0_i32 = arith.constant 0 : i32
    %c0_i32_0 = arith.constant 0 : i32
    return %arg0, %c0_i32 : i32, i32
  }
  func.func @transform_1(%arg0: i32) -> (i32, i32) {
    %c0_i32 = arith.constant 0 : i32
    %c0_i32_0 = arith.constant 0 : i32
    %c0_i32_1 = arith.constant 0 : i32
    return %c0_i32, %c0_i32_0 : i32, i32
  }
  func.func @transform_2(%arg0: i32) -> (i32, i32) {
    %c0_i32 = arith.constant 0 : i32
    %c0_i32_0 = arith.constant 0 : i32
    %c0_i32_1 = arith.constant 0 : i32
    return %c0_i32, %c0_i32_0 : i32, i32
  }
  func.func @transform_3(%arg0: i32) -> (i32, i32) {
    %c0_i32 = arith.constant 0 : i32
    %c0_i32_0 = arith.constant 0 : i32
    return %arg0, %c0_i32 : i32, i32
  }
}

</mosaic_0001>

<llo_original>
// kernel: pt_logreg_forward.1
$region0: #{pt_logreg_forward.1}
  #allocation0 [shape = 'u32[]', space=smem, size = 0x4, offset = 0x4, fixed_abs, tag = 'smem constant byte address 0x4 - core index']
  #allocation1 [shape = 'u32[144,128]{1,0:T(1,128)}', space=vmem, size = 0x12000, scoped, tag = 'internal scratch']
  %s0 = inlined_call_operand.vmem [shape: f32[8,32], index: 0, kind: input, shape index: {}]
  %s1 = inlined_call_operand.vmem [shape: f32[32,16], index: 1, kind: input, shape index: {}]
  %s2 = inlined_call_operand.vmem [shape: f32[1,16], index: 2, kind: input, shape index: {}]
  %s3 = inlined_call_operand.hbm [shape: f32[8,16], index: 3, kind: output, shape index: {}]
  %s4 = sld [smem:[#allocation0]]
  $region22: #{pt_logreg_forward.1} parent=0
    _
  %s6 = ssub.s32 1, %s4
  %s7 = scalar_select 0, %s6, %s4
  $region1: #{pt_logreg_forward.1} parent=0
    #allocation2 [shape = 'u8[4096]{0}', space=vmem, size = 0x1000, scoped, tag = 'output window, operand 0, single buffered']
    #allocation3 [shape = 's32[1]{0}', space=sflag, size = 0x4, scoped, tag = 'scoped memory for pt_logreg_forward.1']
    %8 = vsyncpa [#allocation3], 0
    // Predicated region
    $region2: #{pt_logreg_forward.1} parent=1 // pred_check
      _
    $region3: #{pt_logreg_forward.1} parent=1 // pred_check_branch
      %10 = sbr.rel (0) target = $region5
    $region4: #{pt_logreg_forward.1} parent=1 // pred_region
      _
    $region5: #{pt_logreg_forward.1} parent=1 // pred_fallthru
      _
    // Predicated region
    $region6: #{pt_logreg_forward.1} parent=1 // pred_check
      _
    $region7: #{pt_logreg_forward.1} parent=1 // pred_check_branch
      %12 = sbr.rel (0) target = $region9
    $region8: #{pt_logreg_forward.1} parent=1 // pred_region
      _
    $region9: #{pt_logreg_forward.1} parent=1 // pred_fallthru
      _
    // Predicated region
    $region10: #{pt_logreg_forward.1} parent=1 // pred_check
      _
    $region11: #{pt_logreg_forward.1} parent=1 // pred_check_branch
      %14 = sbr.rel (0) target = $region13
    $region12: #{pt_logreg_forward.1} parent=1 // pred_region
      _
    $region13: #{pt_logreg_forward.1} parent=1 // pred_fallthru
      _
    %v15 = vld [vmem:[%s0] sm:$0xff]
    %v16 = vld [vmem:[%s1] sm:$0xff]
    %v17 = vld [vmem:[%s1 + $0x8] sm:$0xff]
    %v18 = vld [vmem:[%s1 + $0x10] sm:$0xff]
    %v19 = vld [vmem:[%s1 + $0x18] sm:$0xff]
    %v20 = vld [vmem:[%s2] sm:$0x1]
    %v22 = vlaneseq
    %v23 = vshrl.u32 %v22, 7
    %v24 = vsub.s32 0, %v23
    %v25 = vrot.slane %v20, %v24
    %vm27 = vcmask 261120
    %v29 = vsel %vm27, %v15, 0
    %31 = vmatprep.subr.mxu0 0.0
    %32 = vmatpush1.msra.mxu0 %v16
    %33 = vmatprep.subr.mxu0 0.0
    %34 = vmatpush1.msra.mxu0 %v17
    %35 = vmatprep.subr.mxu0 0.0
    %36 = vmatpush1.msra.mxu0 %v18
    %37 = vmatprep.subr.mxu0 0.0
    %38 = vmatpush1.msra.mxu0 %v19
    %39 = vmatprep.subr.mxu0 0.0
    %40 = vmatpush1.msra.mxu0 0.0
    %41 = vmatprep.subr.mxu0 0.0
    %42 = vmatpush1.msra.mxu0 0.0
    %43 = vmatprep.subr.mxu0 0.0
    %44 = vmatpush1.msra.mxu0 0.0
    %45 = vmatprep.subr.mxu0 0.0
    %46 = vmatpush1.msra.mxu0 0.0
    %47 = vmatprep.subr.mxu0 0.0
    %48 = vmatpush1.msra.mxu0 0.0
    %49 = vmatprep.subr.mxu0 0.0
    %50 = vmatpush1.msra.mxu0 0.0
    %51 = vmatprep.subr.mxu0 0.0
    %52 = vmatpush1.msra.mxu0 0.0
    %53 = vmatprep.subr.mxu0 0.0
    %54 = vmatpush1.msra.mxu0 0.0
    %55 = vmatprep.subr.mxu0 0.0
    %56 = vmatpush1.msra.mxu0 0.0
    %57 = vmatprep.subr.mxu0 0.0
    %58 = vmatpush1.msra.mxu0 0.0
    %59 = vmatprep.subr.mxu0 0.0
    %60 = vmatpush1.msra.mxu0 0.0
    %61 = vmatprep.subr.mxu0 0.0
    %62 = vmatpush1.msra.mxu0 0.0
    %63 = vmatprep.subr.mxu0 0.0
    %64 = vmatpush1.msra.mxu0 0.0
    %65 = vmatprep.subr.mxu0 0.0
    %66 = vmatpush1.msra.mxu0 0.0
    %67 = vmatprep.subr.mxu0 0.0
    %68 = vmatpush1.msra.mxu0 0.0
    %69 = vmatprep.subr.mxu0 0.0
    %70 = vmatpush1.msra.mxu0 0.0
    %71 = vmatprep.subr.mxu0 0.0
    %72 = vmatpush1.msra.mxu0 0.0
    %73 = vmatprep.subr.mxu0 0.0
    %74 = vmatpush1.msra.mxu0 0.0
    %75 = vmatprep.subr.mxu0 0.0
    %76 = vmatpush1.msra.mxu0 0.0
    %77 = vmatprep.subr.mxu0 0.0
    %78 = vmatpush1.msra.mxu0 0.0
    %79 = vmatprep.subr.mxu0 0.0
    %80 = vmatpush1.msra.mxu0 0.0
    %81 = vmatprep.subr.mxu0 0.0
    %82 = vmatpush1.msra.mxu0 0.0
    %83 = vmatprep.subr.mxu0 0.0
    %84 = vmatpush1.msra.mxu0 0.0
    %85 = vmatprep.subr.mxu0 0.0
    %86 = vmatpush1.msra.mxu0 0.0
    %87 = vmatprep.subr.mxu0 0.0
    %88 = vmatpush1.msra.mxu0 0.0
    %89 = vmatprep.subr.mxu0 0.0
    %90 = vmatpush1.msra.mxu0 0.0
    %91 = vmatprep.subr.mxu0 0.0
    %92 = vmatpush1.msra.mxu0 0.0
    %93 = vmatprep.subr.mxu0 0.0
    %94 = vmatpush1.msra.mxu0 0.0
    %95 = vmatprep.mubr.f32.mxu0 0.0
    %96 = vmatmul.mubr.f32.gmra.mrb[0].mxu0 %v29
    %v97 = vpop.f32.mrb[0].mxu0
    %v98 = vadd.f32 %v25, %v97
    %v99 = vpop.f32.mrb[0].mxu0
    %100 = vdwg.mxu0
    %vm101 = vcmask 130048
    %v102 = vsel %vm101, %v98, -inf
    %103 = vmax.xlane.f32.xlu0 %v102
    %v104 = vpop.xlane.xlu0 %103
    %v105 = vsub.f32 %v98, %v104
    %v106 = vmul.f32 %v105, 1.442695
    %v107 = vpow.pop %v106
    %v108 = vsel %vm101, %v107, 0.0
    %109 = vadd.xlane.f32.xlu0 %v108
    %v110 = vpop.xlane.xlu0 %109
    %v111 = vrcp.pop %v110
    %v112 = vmul.f32 %v107, %v111
    %113 = vst.msk [vmem:[#allocation2] sm:$0xff] %vm101, %v112
    // Predicated region
    $region14: #{pt_logreg_forward.1} parent=1 // pred_check
      _
    $region15: #{pt_logreg_forward.1} parent=1 // pred_check_branch
      %115 = sbr.rel (0) target = $region17
    $region16: #{pt_logreg_forward.1} parent=1 // pred_region
      %s117 = ssub.s32 128, 128
      %118 = vsyncadd [#allocation3], %s117
      %s120 = sshll.u32 [#allocation2], 4
      %s121 = int_to_ptr.vmem [resolvable:$true] %s120
      %123 = dma.vmem_to_hbm [thread:$0]  %s121, 128, %s3, [#allocation3]
    $region17: #{pt_logreg_forward.1} parent=1 // pred_fallthru
      _
    // Predicated region
    $region18: #{pt_logreg_forward.1} parent=1 // pred_check
      _
    $region19: #{pt_logreg_forward.1} parent=1 // pred_check_branch
      %125 = sbr.rel (0) target = $region21
    $region20: #{pt_logreg_forward.1} parent=1 // pred_region
      %126 = dma.done [#allocation3], 128
    $region21: #{pt_logreg_forward.1} parent=1 // pred_fallthru
      _
    %127 = vsyncpa [#allocation3], 1

</llo_original>
